<compile_context>
chip_gen: v5e
topology: v5e:2x2
jax: 0.10.0
libtpu: 0.0.40
codegen_flags: <defaults>
</compile_context>

<pallas_src>
import math
import numpy as np
import jax
import jax.numpy as jnp
from jax.experimental import pallas as pl
from jax.experimental.pallas import tpu as pltpu

WINDOW_SIZE = 11
SIGMA = 1.5
C1 = 0.01 ** 2
C2 = 0.03 ** 2


def _gaussian_1d(window_size=WINDOW_SIZE, sigma=SIGMA):
    xs = np.arange(window_size, dtype=np.float64)
    g = np.exp(-((xs - window_size // 2) ** 2) / (2.0 * sigma ** 2))
    return (g / g.sum()).astype(np.float32)


def _blur_matrix_np(n, window_size=WINDOW_SIZE):
    """Banded Toeplitz M (n,n): (M @ x) = 1-D gaussian correlation of x along
    axis 0 with zero padding = window_size//2 (same as F.conv2d pad=ws//2)."""
    g = _gaussian_1d(window_size)
    pad = window_size // 2
    idx = np.arange(n)
    d = idx[None, :] - idx[:, None] + pad          # col - row + pad
    valid = (d >= 0) & (d < window_size)
    return np.where(valid, g[np.clip(d, 0, window_size - 1)], 0.0).astype(np.float32)


def _fold_rows8(t):
    """(H, L) -> (8, L): sum 8-row sublane-aligned slabs (pure VPU adds when
    H % 8 == 0; tiny XLU fallback otherwise)."""
    h, l = t.shape
    if h % 8 == 0:
        acc = t[0:8, :]
        for i in range(1, h // 8):
            acc = acc + t[i * 8:(i + 1) * 8, :]
        return acc
    return jnp.concatenate(
        [jnp.sum(t, axis=0, keepdims=True), jnp.zeros((7, l), jnp.float32)],
        axis=0)


def _fold_lanes128(t8):
    """(8, L) -> (8, 128): sum 128-wide lane-aligned slabs (pure VPU adds)."""
    l = t8.shape[1]
    acc = t8[:, 0:128]
    for i in range(1, l // 128):
        acc = acc + t8[:, i * 128:(i + 1) * 128]
    return acc


def _myloss_kernel(es_ref, gt_ref, a_ref, bk_ref, sse_ref, ssim_ref):
    _, gw = es_ref.shape
    ck = bk_ref.shape[0]
    nchunk = gw // ck
    bf = jnp.bfloat16

    x = es_ref[...].astype(jnp.float32)            # (H, G*W) lane-dense
    y = gt_ref[...].astype(jnp.float32)

    # ---- MSE partial sums (exact f32, independent of the bf16 blur path) ----
    d = x - y
    sse_ref[0] = _fold_lanes128(_fold_rows8(d * d))

    a = a_ref[...]       # (H, H)  bf16 vertical blur matrix
    bk = bk_ref[...]     # (ck,ck) bf16 block-diag kron(I, B^T) horizontal blur

    # ---- vertical blurs: 5 full-width MXU matmuls (no concatenation) ----
    def vblur(q):
        return jnp.dot(a, q.astype(bf), preferred_element_type=jnp.float32)

    v_x = vblur(x)
    v_y = vblur(y)
    v_xx = vblur(x * x)
    v_yy = vblur(y * y)
    v_xy = vblur(x * y)

    # ---- horizontal blur + SSIM math, chunked along lane-aligned slabs ----
    # Each chunk matmul output IS one blurred quantity: no (H, 5*gw) concat,
    # no re-slicing of a big intermediate.
    ssim_acc = None
    for c in range(nchunk):
        lo, hi = c * ck, (c + 1) * ck

        def hblur(v):
            return jnp.dot(v[:, lo:hi].astype(bf), bk,
                           preferred_element_type=jnp.float32)

        mu_x = hblur(v_x)
        mu_y = hblur(v_y)
        bxx = hblur(v_xx)
        byy = hblur(v_yy)
        bxy = hblur(v_xy)

        mu_x2 = mu_x * mu_x
        mu_y2 = mu_y * mu_y
        mu_xy = mu_x * mu_y
        sig_x = bxx - mu_x2          # NOTE: bf16-blurred second moments; the
        sig_y = byy - mu_y2          # mu^2 cancellation can lose precision
        sig_xy = bxy - mu_xy         # where variance << mean^2 (damped by the
                                     # 0.001 loss weight).
        num = (2.0 * mu_xy + C1) * (2.0 * sig_xy + C2)
        den = (mu_x2 + mu_y2 + C1) * (sig_x + sig_y + C2)
        ssim_map = num * pl.reciprocal(den, approx=True)   # EUP slot
        part = _fold_lanes128(_fold_rows8(ssim_map))
        ssim_acc = part if ssim_acc is None else ssim_acc + part

    ssim_ref[0] = ssim_acc


def _pick_ck(gw, w):
    """Smallest multiple of w (whole planes -> kron block boundary) that is
    also a multiple of 128 (lane-aligned slices) and divides gw; else gw."""
    c = w
    while c < gw:
        if c % 128 == 0 and gw % c == 0:
            return c
        c += w
    return gw


def myloss(es_map, gt_map):
    """Pallas implementation of Myloss.forward: MSE + 0.001 * (1 - SSIM)."""
    assert es_map.shape == gt_map.shape
    N, C, H, W = es_map.shape
    P = N * C

    # Group G planes per step so the lane width G*W is a multiple of 128; grow
    # toward wider tiles (fewer ~0.35us grid steps, better reuse of resident
    # blur constants) while (a) at least 2 grid steps survive when the plane
    # count allows it (keeps both v7x TCs busy under the parallel grid) and
    # (b) a conservative working-set estimate stays within scoped VMEM.
    g = 128 // math.gcd(W, 128)
    while (g * W < 1024 and P >= 4 * g
           and 96 * H * (2 * g) * W <= (12 << 20)):
        g *= 2
    gw = g * W
    steps = -(-P // g)               # cdiv
    p_pad = steps * g
    n_pad = p_pad - P                # zero-padded planes (corrected below)

    def to_lane_major(t):
        # (p,h,w) -> (h,p,w) -> (h, p*w): layout plumbing for lane-dense
        # blocks; pad the trailing lane axis AFTER the transpose (one pass).
        t = jnp.transpose(t.reshape(P, H, W), (1, 0, 2)).reshape(H, P * W)
        if n_pad:
            t = jnp.pad(t, ((0, 0), (0, n_pad * W)))
        return t

    es2d = to_lane_major(es_map)     # keep original dtype; kernel casts
    gt2d = to_lane_major(gt_map)

    # bf16 blur weights (MXU-native inputs, f32 accumulation in-kernel).
    # Horizontal kron chunk capped near the MXU-native lane width to bound the
    # block-diagonal waste (ck/W x the necessary MACs).
    ck = _pick_ck(gw, W)
    a_mat = jnp.asarray(_blur_matrix_np(H), jnp.bfloat16)                 # (H,H)
    bk = jnp.asarray(
        np.kron(np.eye(ck // W, dtype=np.float32), _blur_matrix_np(W).T),
        jnp.bfloat16)                                                     # (ck,ck)
    # TODO(synk): for H/W >> 128 exploit the 11-wide band of the gaussian
    # (K-tiled banded matmul or 11x pltpu.roll + FMA) instead of the dense
    # Toeplitz/kron matmuls; also consider pl.Buffered(1) on the constant
    # blocks once single-buffering is guaranteed supported.

    sse_p, ssim_p = pl.pallas_call(
        _myloss_kernel,
        out_shape=(jax.ShapeDtypeStruct((steps, 8, 128), jnp.float32),
                   jax.ShapeDtypeStruct((steps, 8, 128), jnp.float32)),
        grid_spec=pltpu.PrefetchScalarGridSpec(
            num_scalar_prefetch=0,
            grid=(steps,),
            in_specs=[
                pl.BlockSpec((H, gw), lambda i: (0, i)),
                pl.BlockSpec((H, gw), lambda i: (0, i)),
                pl.BlockSpec((H, H), lambda i: (0, 0)),     # constant block
                pl.BlockSpec((ck, ck), lambda i: (0, 0)),   # constant block
            ],
            out_specs=[
                pl.BlockSpec((1, 8, 128), lambda i: (i, 0, 0)),
                pl.BlockSpec((1, 8, 128), lambda i: (i, 0, 0)),
            ],
        ),
        # Steps are fully independent (per-step partial outputs, no carried
        # accumulator) -> safe to mark parallel; engages both TCs on v7x.
        compiler_params=pltpu.CompilerParams(
            dimension_semantics=("parallel",),
            vmem_limit_bytes=32 * 1024 * 1024),
    )(es2d, gt2d, a_mat, bk)

    n_elem = jnp.float32(P * H * W)
    sse_total = jnp.sum(sse_p)
    # Zero-padded planes contribute ssim ~= 1 per pixel and exactly 0 SSE.
    ssim_total = jnp.sum(ssim_p) - jnp.float32(n_pad * H * W)
    mse = sse_total / n_elem                       # nn.MSELoss (mean)
    ssim_mean = ssim_total / n_elem                # SSIM(size_average=True)
    return mse + 0.001 * (1.0 - ssim_mean)


if __name__ == "__main__":
    key = jax.random.PRNGKey(0)
    k1, k2 = jax.random.split(key)
    # SSIM module declared with in_channel=3 -> C must be 3.
    es_map = jax.nn.sigmoid(jax.random.normal(k1, (2, 3, 16, 16), jnp.float32))
    gt_map = jax.nn.sigmoid(jax.random.normal(k2, (2, 3, 16, 16), jnp.float32))

    loss = jax.jit(myloss)(es_map, gt_map)
    jax.block_until_ready(loss)
    print("KERNEL_OK")
</pallas_src>

<mosaic_0001>
module attributes {stable_mosaic.version = 11 : i64} {
  func.func @_myloss_kernel(%arg0: i32, %arg1: memref<16x128xf32, #tpu.memory_space<vmem>>, %arg2: memref<16x128xf32, #tpu.memory_space<vmem>>, %arg3: memref<16x16xbf16, #tpu.memory_space<vmem>>, %arg4: memref<128x128xbf16, #tpu.memory_space<vmem>>, %arg5: memref<1x8x128xf32, #tpu.memory_space<vmem>>, %arg6: memref<1x8x128xf32, #tpu.memory_space<vmem>>) attributes {dimension_semantics = [#tpu.dimension_semantics<parallel>], iteration_bounds = array<i64: 1>, scalar_prefetch = 0 : i64, scratch_operands = 0 : i64, tpu.core_type = #tpu.core_type<tc>, window_params = [{transform_indices = @transform_0, window_bounds = array<i64: 16, 128>}, {transform_indices = @transform_1, window_bounds = array<i64: 16, 128>}, {pipeline_mode = #tpu.pipeline_mode<synchronous>, transform_indices = @transform_2, window_bounds = array<i64: 16, 16>}, {pipeline_mode = #tpu.pipeline_mode<synchronous>, transform_indices = @transform_3, window_bounds = array<i64: 128, 128>}, {transform_indices = @transform_4, window_bounds = array<i64: 1, 8, 128>}, {transform_indices = @transform_5, window_bounds = array<i64: 1, 8, 128>}]} {
    %c0 = arith.constant 0 : index
    %c0_0 = arith.constant 0 : index
    %0 = vector.load %arg1[%c0, %c0_0] : memref<16x128xf32, #tpu.memory_space<vmem>>, vector<16x128xf32>
    %c0_1 = arith.constant 0 : index
    %c0_2 = arith.constant 0 : index
    %1 = vector.load %arg2[%c0_1, %c0_2] : memref<16x128xf32, #tpu.memory_space<vmem>>, vector<16x128xf32>
    %2 = arith.subf %0, %1 : vector<16x128xf32>
    %3 = arith.mulf %2, %2 : vector<16x128xf32>
    %4 = vector.extract_strided_slice %3 {offsets = [0, 0], sizes = [8, 128], strides = [1, 1]} : vector<16x128xf32> to vector<8x128xf32>
    %5 = vector.extract_strided_slice %3 {offsets = [8, 0], sizes = [8, 128], strides = [1, 1]} : vector<16x128xf32> to vector<8x128xf32>
    %6 = arith.addf %4, %5 : vector<8x128xf32>
    %c0_3 = arith.constant 0 : index
    %c0_4 = arith.constant 0 : index
    %c0_5 = arith.constant 0 : index
    %7 = vector.load %arg5[%c0_3, %c0_4, %c0_5] : memref<1x8x128xf32, #tpu.memory_space<vmem>>, vector<1x8x128xf32>
    %8 = vector.shape_cast %7 : vector<1x8x128xf32> to vector<8x128xf32>
    %9 = vector.shape_cast %6 : vector<8x128xf32> to vector<1x8x128xf32>
    tpu.vector_store %arg5[%c0_3, %c0_4, %c0_5], %9 {strides = array<i32>} : memref<1x8x128xf32, #tpu.memory_space<vmem>>, vector<1x8x128xf32>,
    %c0_6 = arith.constant 0 : index
    %c0_7 = arith.constant 0 : index
    %10 = vector.load %arg3[%c0_6, %c0_7] : memref<16x16xbf16, #tpu.memory_space<vmem>>, vector<16x16xbf16>
    %c0_8 = arith.constant 0 : index
    %c0_9 = arith.constant 0 : index
    %11 = vector.load %arg4[%c0_8, %c0_9] : memref<128x128xbf16, #tpu.memory_space<vmem>>, vector<128x128xbf16>
    %12 = arith.truncf %0 : vector<16x128xf32> to vector<16x128xbf16>
    %cst = arith.constant dense<0.000000e+00> : vector<16x128xf32>
    %13 = tpu.matmul %10, %12, %cst {dimension_numbers = #tpu.dot_dimension_numbers<[1], [0], [0], [1], [0, 0, 1, 1], [], []>} : vector<16x16xbf16>, vector<16x128xbf16>, vector<16x128xf32> -> vector<16x128xf32>
    %14 = arith.truncf %1 : vector<16x128xf32> to vector<16x128xbf16>
    %cst_10 = arith.constant dense<0.000000e+00> : vector<16x128xf32>
    %15 = tpu.matmul %10, %14, %cst_10 {dimension_numbers = #tpu.dot_dimension_numbers<[1], [0], [0], [1], [0, 0, 1, 1], [], []>} : vector<16x16xbf16>, vector<16x128xbf16>, vector<16x128xf32> -> vector<16x128xf32>
    %16 = arith.mulf %0, %0 : vector<16x128xf32>
    %17 = arith.truncf %16 : vector<16x128xf32> to vector<16x128xbf16>
    %cst_11 = arith.constant dense<0.000000e+00> : vector<16x128xf32>
    %18 = tpu.matmul %10, %17, %cst_11 {dimension_numbers = #tpu.dot_dimension_numbers<[1], [0], [0], [1], [0, 0, 1, 1], [], []>} : vector<16x16xbf16>, vector<16x128xbf16>, vector<16x128xf32> -> vector<16x128xf32>
    %19 = arith.mulf %1, %1 : vector<16x128xf32>
    %20 = arith.truncf %19 : vector<16x128xf32> to vector<16x128xbf16>
    %cst_12 = arith.constant dense<0.000000e+00> : vector<16x128xf32>
    %21 = tpu.matmul %10, %20, %cst_12 {dimension_numbers = #tpu.dot_dimension_numbers<[1], [0], [0], [1], [0, 0, 1, 1], [], []>} : vector<16x16xbf16>, vector<16x128xbf16>, vector<16x128xf32> -> vector<16x128xf32>
    %22 = arith.mulf %0, %1 : vector<16x128xf32>
    %23 = arith.truncf %22 : vector<16x128xf32> to vector<16x128xbf16>
    %cst_13 = arith.constant dense<0.000000e+00> : vector<16x128xf32>
    %24 = tpu.matmul %10, %23, %cst_13 {dimension_numbers = #tpu.dot_dimension_numbers<[1], [0], [0], [1], [0, 0, 1, 1], [], []>} : vector<16x16xbf16>, vector<16x128xbf16>, vector<16x128xf32> -> vector<16x128xf32>
    %25 = arith.truncf %13 : vector<16x128xf32> to vector<16x128xbf16>
    %cst_14 = arith.constant dense<0.000000e+00> : vector<16x128xf32>
    %26 = tpu.matmul %25, %11, %cst_14 {dimension_numbers = #tpu.dot_dimension_numbers<[1], [0], [0], [1], [0, 0, 1, 1], [], []>} : vector<16x128xbf16>, vector<128x128xbf16>, vector<16x128xf32> -> vector<16x128xf32>
    %27 = arith.truncf %15 : vector<16x128xf32> to vector<16x128xbf16>
    %cst_15 = arith.constant dense<0.000000e+00> : vector<16x128xf32>
    %28 = tpu.matmul %27, %11, %cst_15 {dimension_numbers = #tpu.dot_dimension_numbers<[1], [0], [0], [1], [0, 0, 1, 1], [], []>} : vector<16x128xbf16>, vector<128x128xbf16>, vector<16x128xf32> -> vector<16x128xf32>
    %29 = arith.truncf %18 : vector<16x128xf32> to vector<16x128xbf16>
    %cst_16 = arith.constant dense<0.000000e+00> : vector<16x128xf32>
    %30 = tpu.matmul %29, %11, %cst_16 {dimension_numbers = #tpu.dot_dimension_numbers<[1], [0], [0], [1], [0, 0, 1, 1], [], []>} : vector<16x128xbf16>, vector<128x128xbf16>, vector<16x128xf32> -> vector<16x128xf32>
    %31 = arith.truncf %21 : vector<16x128xf32> to vector<16x128xbf16>
    %cst_17 = arith.constant dense<0.000000e+00> : vector<16x128xf32>
    %32 = tpu.matmul %31, %11, %cst_17 {dimension_numbers = #tpu.dot_dimension_numbers<[1], [0], [0], [1], [0, 0, 1, 1], [], []>} : vector<16x128xbf16>, vector<128x128xbf16>, vector<16x128xf32> -> vector<16x128xf32>
    %33 = arith.truncf %24 : vector<16x128xf32> to vector<16x128xbf16>
    %cst_18 = arith.constant dense<0.000000e+00> : vector<16x128xf32>
    %34 = tpu.matmul %33, %11, %cst_18 {dimension_numbers = #tpu.dot_dimension_numbers<[1], [0], [0], [1], [0, 0, 1, 1], [], []>} : vector<16x128xbf16>, vector<128x128xbf16>, vector<16x128xf32> -> vector<16x128xf32>
    %35 = arith.mulf %26, %26 : vector<16x128xf32>
    %36 = arith.mulf %28, %28 : vector<16x128xf32>
    %37 = arith.mulf %26, %28 : vector<16x128xf32>
    %38 = arith.subf %30, %35 : vector<16x128xf32>
    %39 = arith.subf %32, %36 : vector<16x128xf32>
    %40 = arith.subf %34, %37 : vector<16x128xf32>
    %cst_19 = arith.constant 2.000000e+00 : f32
    %41 = vector.broadcast %cst_19 : f32 to vector<16x128xf32>
    %42 = arith.mulf %41, %37 : vector<16x128xf32>
    %cst_20 = arith.constant 9.99999974E-5 : f32
    %43 = vector.broadcast %cst_20 : f32 to vector<16x128xf32>
    %44 = arith.addf %42, %43 : vector<16x128xf32>
    %cst_21 = arith.constant 2.000000e+00 : f32
    %45 = vector.broadcast %cst_21 : f32 to vector<16x128xf32>
    %46 = arith.mulf %45, %40 : vector<16x128xf32>
    %cst_22 = arith.constant 8.99999984E-4 : f32
    %47 = vector.broadcast %cst_22 : f32 to vector<16x128xf32>
    %48 = arith.addf %46, %47 : vector<16x128xf32>
    %49 = arith.mulf %44, %48 : vector<16x128xf32>
    %50 = arith.addf %35, %36 : vector<16x128xf32>
    %cst_23 = arith.constant 9.99999974E-5 : f32
    %51 = vector.broadcast %cst_23 : f32 to vector<16x128xf32>
    %52 = arith.addf %50, %51 : vector<16x128xf32>
    %53 = arith.addf %38, %39 : vector<16x128xf32>
    %cst_24 = arith.constant 8.99999984E-4 : f32
    %54 = vector.broadcast %cst_24 : f32 to vector<16x128xf32>
    %55 = arith.addf %53, %54 : vector<16x128xf32>
    %56 = arith.mulf %52, %55 : vector<16x128xf32>
    %57 = tpu.reciprocal %56 {approx = true} : vector<16x128xf32> -> vector<16x128xf32>
    %58 = arith.mulf %49, %57 : vector<16x128xf32>
    %59 = vector.extract_strided_slice %58 {offsets = [0, 0], sizes = [8, 128], strides = [1, 1]} : vector<16x128xf32> to vector<8x128xf32>
    %60 = vector.extract_strided_slice %58 {offsets = [8, 0], sizes = [8, 128], strides = [1, 1]} : vector<16x128xf32> to vector<8x128xf32>
    %61 = arith.addf %59, %60 : vector<8x128xf32>
    %c0_25 = arith.constant 0 : index
    %c0_26 = arith.constant 0 : index
    %c0_27 = arith.constant 0 : index
    %62 = vector.load %arg6[%c0_25, %c0_26, %c0_27] : memref<1x8x128xf32, #tpu.memory_space<vmem>>, vector<1x8x128xf32>
    %63 = vector.shape_cast %62 : vector<1x8x128xf32> to vector<8x128xf32>
    %64 = vector.shape_cast %61 : vector<8x128xf32> to vector<1x8x128xf32>
    tpu.vector_store %arg6[%c0_25, %c0_26, %c0_27], %64 {strides = array<i32>} : memref<1x8x128xf32, #tpu.memory_space<vmem>>, vector<1x8x128xf32>,
    return
  }
  func.func @transform_0(%arg0: i32) -> (i32, i32) {
    %c0_i32 = arith.constant 0 : i32
    %c0_i32_0 = arith.constant 0 : i32
    return %c0_i32, %arg0 : i32, i32
  }
  func.func @transform_1(%arg0: i32) -> (i32, i32) {
    %c0_i32 = arith.constant 0 : i32
    %c0_i32_0 = arith.constant 0 : i32
    return %c0_i32, %arg0 : i32, i32
  }
  func.func @transform_2(%arg0: i32) -> (i32, i32) {
    %c0_i32 = arith.constant 0 : i32
    %c0_i32_0 = arith.constant 0 : i32
    %c0_i32_1 = arith.constant 0 : i32
    return %c0_i32, %c0_i32_0 : i32, i32
  }
  func.func @transform_3(%arg0: i32) -> (i32, i32) {
    %c0_i32 = arith.constant 0 : i32
    %c0_i32_0 = arith.constant 0 : i32
    %c0_i32_1 = arith.constant 0 : i32
    return %c0_i32, %c0_i32_0 : i32, i32
  }
  func.func @transform_4(%arg0: i32) -> (i32, i32, i32) {
    %c0_i32 = arith.constant 0 : i32
    %c0_i32_0 = arith.constant 0 : i32
    %c0_i32_1 = arith.constant 0 : i32
    return %arg0, %c0_i32, %c0_i32_0 : i32, i32, i32
  }
  func.func @transform_5(%arg0: i32) -> (i32, i32, i32) {
    %c0_i32 = arith.constant 0 : i32
    %c0_i32_0 = arith.constant 0 : i32
    %c0_i32_1 = arith.constant 0 : i32
    return %arg0, %c0_i32, %c0_i32_0 : i32, i32, i32
  }
}

</mosaic_0001>

<llo_original>
// kernel: myloss.1
$region0: #{myloss.1}
  #allocation0 [shape = 'u32[]', space=smem, size = 0x4, offset = 0x4, fixed_abs, tag = 'smem constant byte address 0x4 - core index']
  #allocation1 [shape = 'u32[72,128]{1,0:T(1,128)}', space=vmem, size = 0x9000, scoped, tag = 'internal scratch']
  %s0 = inlined_call_operand.vmem [shape: f32[16,128], index: 0, kind: input, shape index: {}]
  %s1 = inlined_call_operand.vmem [shape: f32[16,128], index: 1, kind: input, shape index: {}]
  %s2 = inlined_call_operand.vmem [shape: bf16[16,16], index: 2, kind: input, shape index: {}]
  %s3 = inlined_call_operand.vmem [shape: bf16[128,128], index: 3, kind: input, shape index: {}]
  %s4 = inlined_call_operand.vmem [shape: f32[1,8,128], index: 4, kind: output, shape index: {0}]
  %s5 = inlined_call_operand.vmem [shape: f32[1,8,128], index: 5, kind: output, shape index: {1}]
  %6 = xla_tuple %s4, %s5
  %s7 = sld [smem:[#allocation0]]
  $region34: #{myloss.1} parent=0
    _
  %s9 = ssub.s32 1, %s7
  %s10 = scalar_select 0, %s9, %s7
  // Predicated region
  $region2: #{myloss.1} parent=0 // pred_check
    _
  $region3: #{myloss.1} parent=0 // pred_check_branch
    %12 = sbr.rel (0) target = $region5
  $region4: #{myloss.1} parent=0 // pred_region
    _
  $region5: #{myloss.1} parent=0 // pred_fallthru
    _
  // Predicated region
  $region6: #{myloss.1} parent=0 // pred_check
    _
  $region7: #{myloss.1} parent=0 // pred_check_branch
    %14 = sbr.rel (0) target = $region9
  $region8: #{myloss.1} parent=0 // pred_region
    _
  $region9: #{myloss.1} parent=0 // pred_fallthru
    _
  // Predicated region
  $region10: #{myloss.1} parent=0 // pred_check
    _
  $region11: #{myloss.1} parent=0 // pred_check_branch
    %16 = sbr.rel (0) target = $region13
  $region12: #{myloss.1} parent=0 // pred_region
    _
  $region13: #{myloss.1} parent=0 // pred_fallthru
    _
  // Predicated region
  $region14: #{myloss.1} parent=0 // pred_check
    _
  $region15: #{myloss.1} parent=0 // pred_check_branch
    %18 = sbr.rel (0) target = $region17
  $region16: #{myloss.1} parent=0 // pred_region
    _
  $region17: #{myloss.1} parent=0 // pred_fallthru
    _
  %v20 = vld [vmem:[%s0] sm:$0xff]
  %v21 = vld [vmem:[%s0 + $0x8] sm:$0xff]
  %v22 = vld [vmem:[%s1] sm:$0xff]
  %v23 = vld [vmem:[%s1 + $0x8] sm:$0xff]
  %v24 = vsub.f32 %v20, %v22
  %v25 = vsub.f32 %v21, %v23
  %v26 = vmul.f32 %v24, %v24
  %v27 = vmul.f32 %v25, %v25
  %v28 = vadd.f32 %v26, %v27
  %29 = vst [vmem:[%s4] sm:$0xff] %v28
  %v30 = vld [vmem:[%s2] sm:$0xf]
  %v31 = vld [vmem:[%s2 + $0x4] sm:$0xf]
  %v32 = vld [vmem:[%s3] sm:$0xf]
  %v33 = vld [vmem:[%s3 + $0x4] sm:$0xf]
  %v34 = vld [vmem:[%s3 + $0x8] sm:$0xf]
  %v35 = vld [vmem:[%s3 + $0xc] sm:$0xf]
  %v36 = vld [vmem:[%s3 + $0x10] sm:$0xf]
  %v37 = vld [vmem:[%s3 + $0x14] sm:$0xf]
  %v38 = vld [vmem:[%s3 + $0x18] sm:$0xf]
  %v39 = vld [vmem:[%s3 + $0x1c] sm:$0xf]
  %v40 = vld [vmem:[%s3 + $0x20] sm:$0xf]
  %v41 = vld [vmem:[%s3 + $0x24] sm:$0xf]
  %v42 = vld [vmem:[%s3 + $0x28] sm:$0xf]
  %v43 = vld [vmem:[%s3 + $0x2c] sm:$0xf]
  %v44 = vld [vmem:[%s3 + $0x30] sm:$0xf]
  %v45 = vld [vmem:[%s3 + $0x34] sm:$0xf]
  %v46 = vld [vmem:[%s3 + $0x38] sm:$0xf]
  %v47 = vld [vmem:[%s3 + $0x3c] sm:$0xf]
  %v48 = vpack.c.bf16 %v21, %v20
  %v51 = vunpack.c.l.b16 %v30
  %v52 = vunpack.c.l.b16 %v31
  %v53 = vpack.c.b16 %v52, %v51
  %vm54 = vcmask 130048
  %v56 = vsel %vm54, %v53, 0
  %58 = vmatpush.bf16.msra.mxu0 0
  %59 = vmatpush.bf16.msra.mxu0 0
  %60 = vmatpush.bf16.msra.mxu0 0
  %61 = vmatpush.bf16.msra.mxu0 0
  %62 = vmatpush.bf16.msra.mxu0 0
  %63 = vmatpush.bf16.msra.mxu0 0
  %64 = vmatpush.bf16.msra.mxu0 0
  %65 = vmatpush.bf16.msra.mxu0 %v48
  %66 = vmatmul.bf16.gmra.mxu0 %v56
  %v67 = vpop.f32.mrf.mxu0
  %v68 = vadd.f32 0.0, %v67
  %v69 = vpop.f32.mrf.mxu0
  %v70 = vadd.f32 0.0, %v69
  %71 = vdwg.mxu0
  %v72 = vpack.c.bf16 %v23, %v22
  %73 = vmatpush.bf16.msra.mxu0 0
  %74 = vmatpush.bf16.msra.mxu0 0
  %75 = vmatpush.bf16.msra.mxu0 0
  %76 = vmatpush.bf16.msra.mxu0 0
  %77 = vmatpush.bf16.msra.mxu0 0
  %78 = vmatpush.bf16.msra.mxu0 0
  %79 = vmatpush.bf16.msra.mxu0 0
  %80 = vmatpush.bf16.msra.mxu0 %v72
  %81 = vmatmul.bf16.gmra.mxu0 %v56
  %v82 = vpop.f32.mrf.mxu0
  %v83 = vadd.f32 0.0, %v82
  %v84 = vpop.f32.mrf.mxu0
  %v85 = vadd.f32 0.0, %v84
  %86 = vdwg.mxu0
  %v87 = vmul.f32 %v20, %v20
  %v88 = vmul.f32 %v21, %v21
  %v89 = vpack.c.bf16 %v88, %v87
  %90 = vmatpush.bf16.msra.mxu0 0
  %91 = vmatpush.bf16.msra.mxu0 0
  %92 = vmatpush.bf16.msra.mxu0 0
  %93 = vmatpush.bf16.msra.mxu0 0
  %94 = vmatpush.bf16.msra.mxu0 0
  %95 = vmatpush.bf16.msra.mxu0 0
  %96 = vmatpush.bf16.msra.mxu0 0
  %97 = vmatpush.bf16.msra.mxu0 %v89
  %98 = vmatmul.bf16.gmra.mxu0 %v56
  %v99 = vpop.f32.mrf.mxu0
  %v100 = vadd.f32 0.0, %v99
  %v101 = vpop.f32.mrf.mxu0
  %v102 = vadd.f32 0.0, %v101
  %103 = vdwg.mxu0
  %v104 = vmul.f32 %v22, %v22
  %v105 = vmul.f32 %v23, %v23
  %v106 = vpack.c.bf16 %v105, %v104
  %107 = vmatpush.bf16.msra.mxu0 0
  %108 = vmatpush.bf16.msra.mxu0 0
  %109 = vmatpush.bf16.msra.mxu0 0
  %110 = vmatpush.bf16.msra.mxu0 0
  %111 = vmatpush.bf16.msra.mxu0 0
  %112 = vmatpush.bf16.msra.mxu0 0
  %113 = vmatpush.bf16.msra.mxu0 0
  %114 = vmatpush.bf16.msra.mxu0 %v106
  %115 = vmatmul.bf16.gmra.mxu0 %v56
  %v116 = vpop.f32.mrf.mxu0
  %v117 = vadd.f32 0.0, %v116
  %v118 = vpop.f32.mrf.mxu0
  %v119 = vadd.f32 0.0, %v118
  %120 = vdwg.mxu0
  %v121 = vmul.f32 %v20, %v22
  %v122 = vmul.f32 %v21, %v23
  %v123 = vpack.c.bf16 %v122, %v121
  %124 = vmatpush.bf16.msra.mxu0 0
  %125 = vmatpush.bf16.msra.mxu0 0
  %126 = vmatpush.bf16.msra.mxu0 0
  %127 = vmatpush.bf16.msra.mxu0 0
  %128 = vmatpush.bf16.msra.mxu0 0
  %129 = vmatpush.bf16.msra.mxu0 0
  %130 = vmatpush.bf16.msra.mxu0 0
  %131 = vmatpush.bf16.msra.mxu0 %v123
  %132 = vmatmul.bf16.gmra.mxu0 %v56
  %v133 = vpop.f32.mrf.mxu0
  %v134 = vadd.f32 0.0, %v133
  %v135 = vpop.f32.mrf.mxu0
  %v136 = vadd.f32 0.0, %v135
  %137 = vdwg.mxu0
  %v138 = vpack.c.bf16 %v70, %v68
  %v155 = vunpack.c.l.b16 %v32
  %v156 = vunpack.c.l.b16 %v33
  %v157 = vunpack.c.l.b16 %v34
  %v158 = vunpack.c.l.b16 %v35
  %v159 = vunpack.c.l.b16 %v36
  %v160 = vunpack.c.l.b16 %v37
  %v161 = vunpack.c.l.b16 %v38
  %v162 = vunpack.c.l.b16 %v39
  %v163 = vunpack.c.l.b16 %v40
  %v164 = vunpack.c.l.b16 %v41
  %v165 = vunpack.c.l.b16 %v42
  %v166 = vunpack.c.l.b16 %v43
  %v167 = vunpack.c.l.b16 %v44
  %v168 = vunpack.c.l.b16 %v45
  %v169 = vunpack.c.l.b16 %v46
  %v170 = vunpack.c.l.b16 %v47
  %v171 = vpack.c.b16 %v156, %v155
  %v172 = vpack.c.b16 %v158, %v157
  %v173 = vpack.c.b16 %v160, %v159
  %v174 = vpack.c.b16 %v162, %v161
  %v175 = vpack.c.b16 %v164, %v163
  %v176 = vpack.c.b16 %v166, %v165
  %v177 = vpack.c.b16 %v168, %v167
  %v178 = vpack.c.b16 %v170, %v169
  %187 = vmatpush.bf16.msra.mxu0 %v178
  %188 = vmatpush.bf16.msra.mxu0 %v177
  %189 = vmatpush.bf16.msra.mxu0 %v176
  %190 = vmatpush.bf16.msra.mxu0 %v175
  %191 = vmatpush.bf16.msra.mxu0 %v174
  %192 = vmatpush.bf16.msra.mxu0 %v173
  %193 = vmatpush.bf16.msra.mxu0 %v172
  %194 = vmatpush.bf16.msra.mxu0 %v171
  %195 = vmatmul.bf16.gmra.mxu0 %v138
  %v196 = vpop.f32.mrf.mxu0
  %v197 = vadd.f32 0.0, %v196
  %v198 = vpop.f32.mrf.mxu0
  %v199 = vadd.f32 0.0, %v198
  %200 = vdwg.mxu0
  %v201 = vpack.c.bf16 %v85, %v83
  %202 = vmatpush.bf16.msra.mxu0 %v178
  %203 = vmatpush.bf16.msra.mxu0 %v177
  %204 = vmatpush.bf16.msra.mxu0 %v176
  %205 = vmatpush.bf16.msra.mxu0 %v175
  %206 = vmatpush.bf16.msra.mxu0 %v174
  %207 = vmatpush.bf16.msra.mxu0 %v173
  %208 = vmatpush.bf16.msra.mxu0 %v172
  %209 = vmatpush.bf16.msra.mxu0 %v171
  %210 = vmatmul.bf16.gmra.mxu0 %v201
  %v211 = vpop.f32.mrf.mxu0
  %v212 = vadd.f32 0.0, %v211
  %v213 = vpop.f32.mrf.mxu0
  %v214 = vadd.f32 0.0, %v213
  %215 = vdwg.mxu0
  %v216 = vpack.c.bf16 %v102, %v100
  %217 = vmatpush.bf16.msra.mxu0 %v178
  %218 = vmatpush.bf16.msra.mxu0 %v177
  %219 = vmatpush.bf16.msra.mxu0 %v176
  %220 = vmatpush.bf16.msra.mxu0 %v175
  %221 = vmatpush.bf16.msra.mxu0 %v174
  %222 = vmatpush.bf16.msra.mxu0 %v173
  %223 = vmatpush.bf16.msra.mxu0 %v172
  %224 = vmatpush.bf16.msra.mxu0 %v171
  %225 = vmatmul.bf16.gmra.mxu0 %v216
  %v226 = vpop.f32.mrf.mxu0
  %v227 = vadd.f32 0.0, %v226
  %v228 = vpop.f32.mrf.mxu0
  %v229 = vadd.f32 0.0, %v228
  %230 = vdwg.mxu0
  %v231 = vpack.c.bf16 %v119, %v117
  %232 = vmatpush.bf16.msra.mxu0 %v178
  %233 = vmatpush.bf16.msra.mxu0 %v177
  %234 = vmatpush.bf16.msra.mxu0 %v176
  %235 = vmatpush.bf16.msra.mxu0 %v175
  %236 = vmatpush.bf16.msra.mxu0 %v174
  %237 = vmatpush.bf16.msra.mxu0 %v173
  %238 = vmatpush.bf16.msra.mxu0 %v172
  %239 = vmatpush.bf16.msra.mxu0 %v171
  %240 = vmatmul.bf16.gmra.mxu0 %v231
  %v241 = vpop.f32.mrf.mxu0
  %v242 = vadd.f32 0.0, %v241
  %v243 = vpop.f32.mrf.mxu0
  %v244 = vadd.f32 0.0, %v243
  %245 = vdwg.mxu0
  %v246 = vpack.c.bf16 %v136, %v134
  %247 = vmatpush.bf16.msra.mxu0 %v178
  %248 = vmatpush.bf16.msra.mxu0 %v177
  %249 = vmatpush.bf16.msra.mxu0 %v176
  %250 = vmatpush.bf16.msra.mxu0 %v175
  %251 = vmatpush.bf16.msra.mxu0 %v174
  %252 = vmatpush.bf16.msra.mxu0 %v173
  %253 = vmatpush.bf16.msra.mxu0 %v172
  %254 = vmatpush.bf16.msra.mxu0 %v171
  %255 = vmatmul.bf16.gmra.mxu0 %v246
  %v256 = vpop.f32.mrf.mxu0
  %v257 = vadd.f32 0.0, %v256
  %v258 = vpop.f32.mrf.mxu0
  %v259 = vadd.f32 0.0, %v258
  %260 = vdwg.mxu0
  %v261 = vmul.f32 %v197, %v197
  %v262 = vmul.f32 %v199, %v199
  %v263 = vmul.f32 %v212, %v212
  %v264 = vmul.f32 %v214, %v214
  %v265 = vmul.f32 %v197, %v212
  %v266 = vmul.f32 %v199, %v214
  %v267 = vsub.f32 %v227, %v261
  %v268 = vsub.f32 %v229, %v262
  %v269 = vsub.f32 %v242, %v263
  %v270 = vsub.f32 %v244, %v264
  %v271 = vsub.f32 %v257, %v265
  %v272 = vsub.f32 %v259, %v266
  %v273 = vmul.f32 %v265, 2.0
  %v274 = vmul.f32 %v266, 2.0
  %v275 = vadd.f32 %v273, 0.0001
  %v276 = vadd.f32 %v274, 0.0001
  %v277 = vmul.f32 %v271, 2.0
  %v278 = vmul.f32 %v272, 2.0
  %v279 = vadd.f32 %v277, 0.0009
  %v280 = vadd.f32 %v278, 0.0009
  %v281 = vmul.f32 %v275, %v279
  %v282 = vmul.f32 %v276, %v280
  %v283 = vadd.f32 %v261, %v263
  %v284 = vadd.f32 %v262, %v264
  %v285 = vadd.f32 %v283, 0.0001
  %v286 = vadd.f32 %v284, 0.0001
  %v287 = vadd.f32 %v267, %v269
  %v288 = vadd.f32 %v268, %v270
  %v289 = vadd.f32 %v287, 0.0009
  %v290 = vadd.f32 %v288, 0.0009
  %v291 = vmul.f32 %v285, %v289
  %v292 = vmul.f32 %v286, %v290
  %v293 = vrcp.pop %v291
  %v294 = vrcp.pop %v292
  %v295 = vmul.f32 %v281, %v293
  %v296 = vmul.f32 %v282, %v294
  %v297 = vadd.f32 %v295, %v296
  %298 = vst [vmem:[%s5] sm:$0xff] %v297
  // Predicated region
  $region18: #{myloss.1} parent=0 // pred_check
    _
  $region19: #{myloss.1} parent=0 // pred_check_branch
    %300 = sbr.rel (0) target = $region21
  $region20: #{myloss.1} parent=0 // pred_region
    _
  $region21: #{myloss.1} parent=0 // pred_fallthru
    _
  // Predicated region
  $region22: #{myloss.1} parent=0 // pred_check
    _
  $region23: #{myloss.1} parent=0 // pred_check_branch
    %302 = sbr.rel (0) target = $region25
  $region24: #{myloss.1} parent=0 // pred_region
    _
  $region25: #{myloss.1} parent=0 // pred_fallthru
    _
  // Predicated region
  $region26: #{myloss.1} parent=0 // pred_check
    _
  $region27: #{myloss.1} parent=0 // pred_check_branch
    %304 = sbr.rel (0) target = $region29
  $region28: #{myloss.1} parent=0 // pred_region
    _
  $region29: #{myloss.1} parent=0 // pred_fallthru
    _
  // Predicated region
  $region30: #{myloss.1} parent=0 // pred_check
    _
  $region31: #{myloss.1} parent=0 // pred_check_branch
    %306 = sbr.rel (0) target = $region33
  $region32: #{myloss.1} parent=0 // pred_region
    _
  $region33: #{myloss.1} parent=0 // pred_fallthru
    _

</llo_original>
